<compile_context>
chip_gen: v7x
topology: tpu7x:2x2x1
jax: 0.10.0
libtpu: 0.0.40
codegen_flags: <defaults>
</compile_context>

<pallas_src>
import numpy as np
import jax
import jax.numpy as jnp
from jax.experimental import pallas as pl
from jax.experimental.pallas import tpu as pltpu


def _series_decomp_kernel(x_ref, a_ref, res_ref, mean_ref):
    x = x_ref[...]                                                       # (Bp, Lp)
    mean = jnp.dot(x, a_ref[...], preferred_element_type=jnp.float32)    # MXU
    mean_ref[...] = mean
    res_ref[...] = x - mean                                              # VPU


def _round_up(n, m):
    return ((n + m - 1) // m) * m


def _build_moving_avg_matrix(L, kernel_size):
    """A such that (x @ A)[b, t] == AvgPool1d(k,1)(replicate-pad(x))[b, t]."""
    pad = (kernel_size - 1) // 2
    inv_k = 1.0 / float(kernel_size)
    A = np.zeros((L, L), np.float32)
    for t in range(L):
        for off in range(kernel_size):
            src = min(max(t + off - pad, 0), L - 1)   # replicate padding via clamping
            A[src, t] += inv_k
    return A


def series_decomp_pallas(x, kernel_size):
    """Fused SeriesDecomp forward: returns (res, moving_mean), each (B, L)."""
    B, L = x.shape
    Bp = _round_up(B, 8)       # sublane-aligned
    Lp = _round_up(L, 128)     # lane-dense output slab

    A_np = np.zeros((Lp, Lp), np.float32)
    A_np[:L, :L] = _build_moving_avg_matrix(L, kernel_size)
    A = jnp.asarray(A_np)

    x_pad = jnp.zeros((Bp, Lp), jnp.float32).at[:B, :L].set(x.astype(jnp.float32))

    res_pad, mean_pad = pl.pallas_call(
        _series_decomp_kernel,
        out_shape=(jax.ShapeDtypeStruct((Bp, Lp), jnp.float32),
                   jax.ShapeDtypeStruct((Bp, Lp), jnp.float32)),
        in_specs=[pl.BlockSpec(memory_space=pltpu.MemorySpace.VMEM),
                  pl.BlockSpec(memory_space=pltpu.MemorySpace.VMEM)],
        out_specs=(pl.BlockSpec(memory_space=pltpu.MemorySpace.VMEM),
                   pl.BlockSpec(memory_space=pltpu.MemorySpace.VMEM)),
    )(x_pad, A)

    return res_pad[:B, :L], mean_pad[:B, :L]


def series_decomp_ref(x, kernel_size):
    """Pure-JAX reference mirroring the PyTorch module exactly."""
    pad = (kernel_size - 1) // 2
    front = jnp.repeat(x[:, :1], pad, axis=1)
    end = jnp.repeat(x[:, -1:], pad, axis=1)
    xp = jnp.concatenate([front, x, end], axis=1)
    L = x.shape[1]
    mean = jnp.stack(
        [xp[:, t:t + kernel_size].mean(axis=1) for t in range(L)], axis=1)
    return x - mean, mean


if __name__ == "__main__":
    # Small shapes consistent with the module: x is (batch, seq_len), odd kernel.
    B, L = 8, 16
    kernel_size = 5
    assert kernel_size % 2 == 1

    key = jax.random.PRNGKey(0)
    x = jax.random.normal(key, (B, L), dtype=jnp.float32)

    res, mean = series_decomp_pallas(x, kernel_size)
    res, mean = jax.block_until_ready((res, mean))
    assert res.shape == (B, L) and mean.shape == (B, L)

    res_ref, mean_ref = series_decomp_ref(x, kernel_size)
    np.testing.assert_allclose(np.asarray(mean), np.asarray(mean_ref), rtol=1e-4, atol=1e-4)
    np.testing.assert_allclose(np.asarray(res), np.asarray(res_ref), rtol=1e-4, atol=1e-4)

    print("KERNEL_OK")
</pallas_src>

<mosaic_0001>
module attributes {stable_mosaic.version = 11 : i64} {
  func.func @_series_decomp_kernel(%arg0: memref<8x128xf32, #tpu.memory_space<vmem>>, %arg1: memref<128x128xf32, #tpu.memory_space<vmem>>, %arg2: memref<8x128xf32, #tpu.memory_space<vmem>>, %arg3: memref<8x128xf32, #tpu.memory_space<vmem>>) attributes {dimension_semantics = [], scalar_prefetch = 0 : i64, scratch_operands = 0 : i64, tpu.core_type = #tpu.core_type<tc>} {
    %c0 = arith.constant 0 : index
    %c0_0 = arith.constant 0 : index
    %0 = vector.load %arg0[%c0, %c0_0] : memref<8x128xf32, #tpu.memory_space<vmem>>, vector<8x128xf32>
    %c0_1 = arith.constant 0 : index
    %c0_2 = arith.constant 0 : index
    %1 = vector.load %arg1[%c0_1, %c0_2] : memref<128x128xf32, #tpu.memory_space<vmem>>, vector<128x128xf32>
    %cst = arith.constant dense<0.000000e+00> : vector<8x128xf32>
    %2 = tpu.matmul %0, %1, %cst {dimension_numbers = #tpu.dot_dimension_numbers<[1], [0], [0], [1], [0, 0, 1, 1], [], []>} : vector<8x128xf32>, vector<128x128xf32>, vector<8x128xf32> -> vector<8x128xf32>
    %c0_3 = arith.constant 0 : index
    %c0_4 = arith.constant 0 : index
    %3 = vector.load %arg3[%c0_3, %c0_4] : memref<8x128xf32, #tpu.memory_space<vmem>>, vector<8x128xf32>
    tpu.vector_store %arg3[%c0_3, %c0_4], %2 {strides = array<i32>} : memref<8x128xf32, #tpu.memory_space<vmem>>, vector<8x128xf32>,
    %4 = arith.subf %0, %2 : vector<8x128xf32>
    %c0_5 = arith.constant 0 : index
    %c0_6 = arith.constant 0 : index
    %5 = vector.load %arg2[%c0_5, %c0_6] : memref<8x128xf32, #tpu.memory_space<vmem>>, vector<8x128xf32>
    tpu.vector_store %arg2[%c0_5, %c0_6], %4 {strides = array<i32>} : memref<8x128xf32, #tpu.memory_space<vmem>>, vector<8x128xf32>,
    return
  }
}

</mosaic_0001>

<llo_original>
// kernel: tpu_custom_call.1
$region0: #{tpu_custom_call.1}
  #allocation0 [shape = 'u32[]', space=smem, size = 0x4, offset = 0x4, fixed_abs, tag = 'smem constant byte address 0x4 - core index']
  #allocation1 [shape = 'u32[144,128]{1,0:T(1,128)}', space=vmem, size = 0x12000, scoped, tag = 'internal scratch']
  %s0 = inlined_call_operand.hbm [shape: f32[8,128], index: 0, kind: input, shape index: {}]
  %s1 = inlined_call_operand.hbm [shape: f32[128,128], index: 1, kind: input, shape index: {}]
  %s2 = inlined_call_operand.hbm [shape: f32[8,128], index: 2, kind: output, shape index: {0}]
  %s3 = inlined_call_operand.hbm [shape: f32[8,128], index: 3, kind: output, shape index: {1}]
  %4 = xla_tuple %s2, %s3
  %s5 = sld [smem:[#allocation0]]
  $region34: #{tpu_custom_call.1} parent=0
    _
  %s7 = ssub.s32 1, %s5
  %s8 = scalar_select 0, %s7, %s5
  $region1: #{tpu_custom_call.1} parent=0
    #allocation2 [shape = 'u8[4096]{0}', space=vmem, size = 0x1000, scoped, tag = 'input window, operand 0, single buffered']
    #allocation3 [shape = 's32[1]{0}', space=sflag, size = 0x4, scoped, tag = 'scoped memory for tpu_custom_call.1']
    #allocation4 [shape = 's32[1]{0}', space=sflag, size = 0x4, scoped, tag = 'scoped memory for tpu_custom_call.1']
    #allocation5 [shape = 'u8[65536]{0}', space=vmem, size = 0x10000, scoped, tag = 'input window, operand 1, single buffered']
    #allocation6 [shape = 's32[1]{0}', space=sflag, size = 0x4, scoped, tag = 'scoped memory for tpu_custom_call.1']
    #allocation7 [shape = 'u8[4096]{0}', space=vmem, size = 0x1000, scoped, tag = 'output window, operand 0, single buffered']
    #allocation8 [shape = 'u8[4096]{0}', space=vmem, size = 0x1000, scoped, tag = 'output window, operand 1, single buffered']
    #allocation9 [shape = 's32[1]{0}', space=sflag, size = 0x4, scoped, tag = 'scoped memory for tpu_custom_call.1']
    %9 = vsyncpa [#allocation3], 0
    %10 = vsyncpa [#allocation6], 0
    %11 = vsyncpa [#allocation4], 0
    %12 = vsyncpa [#allocation9], 0
    // Predicated region
    $region2: #{tpu_custom_call.1} parent=1 // pred_check
      _
    $region3: #{tpu_custom_call.1} parent=1 // pred_check_branch
      %14 = sbr.rel (0) target = $region5
    $region4: #{tpu_custom_call.1} parent=1 // pred_region
      %s16 = ssub.s32 128, 128
      %17 = vsyncadd [#allocation3], %s16
      %s19 = sshll.u32 [#allocation2], 4
      %s20 = int_to_ptr.vmem [resolvable:$true] %s19
      %22 = dma.hbm_to_vmem [thread:$0]  %s0, 128, %s20, [#allocation3]
    $region5: #{tpu_custom_call.1} parent=1 // pred_fallthru
      _
    // Predicated region
    $region6: #{tpu_custom_call.1} parent=1 // pred_check
      _
    $region7: #{tpu_custom_call.1} parent=1 // pred_check_branch
      %24 = sbr.rel (0) target = $region9
    $region8: #{tpu_custom_call.1} parent=1 // pred_region
      %s26 = ssub.s32 2048, 2048
      %27 = vsyncadd [#allocation6], %s26
      %s28 = sshll.u32 [#allocation5], 4
      %s29 = int_to_ptr.vmem [resolvable:$true] %s28
      %34 = dma.hbm_to_vmem [thread:$0]  %s1, 2048, %s29, [#allocation6], 128, 128, 8
    $region9: #{tpu_custom_call.1} parent=1 // pred_fallthru
      _
    // Predicated region
    $region10: #{tpu_custom_call.1} parent=1 // pred_check
      _
    $region11: #{tpu_custom_call.1} parent=1 // pred_check_branch
      %36 = sbr.rel (0) target = $region13
    $region12: #{tpu_custom_call.1} parent=1 // pred_region
      %37 = dma.done [#allocation3], 128
    $region13: #{tpu_custom_call.1} parent=1 // pred_fallthru
      _
    // Predicated region
    $region14: #{tpu_custom_call.1} parent=1 // pred_check
      _
    $region15: #{tpu_custom_call.1} parent=1 // pred_check_branch
      %39 = sbr.rel (0) target = $region17
    $region16: #{tpu_custom_call.1} parent=1 // pred_region
      %40 = dma.done [#allocation6], 2048
    $region17: #{tpu_custom_call.1} parent=1 // pred_fallthru
      _
    %v41 = vld [vmem:[#allocation2] sm:$0xff]
    %v42 = vld [vmem:[#allocation5] sm:$0xff]
    %v43 = vld [vmem:[#allocation5 + $0x8] sm:$0xff]
    %v44 = vld [vmem:[#allocation5 + $0x10] sm:$0xff]
    %v45 = vld [vmem:[#allocation5 + $0x18] sm:$0xff]
    %v46 = vld [vmem:[#allocation5 + $0x20] sm:$0xff]
    %v47 = vld [vmem:[#allocation5 + $0x28] sm:$0xff]
    %v48 = vld [vmem:[#allocation5 + $0x30] sm:$0xff]
    %v49 = vld [vmem:[#allocation5 + $0x38] sm:$0xff]
    %v50 = vld [vmem:[#allocation5 + $0x40] sm:$0xff]
    %v51 = vld [vmem:[#allocation5 + $0x48] sm:$0xff]
    %v52 = vld [vmem:[#allocation5 + $0x50] sm:$0xff]
    %v53 = vld [vmem:[#allocation5 + $0x58] sm:$0xff]
    %v54 = vld [vmem:[#allocation5 + $0x60] sm:$0xff]
    %v55 = vld [vmem:[#allocation5 + $0x68] sm:$0xff]
    %v56 = vld [vmem:[#allocation5 + $0x70] sm:$0xff]
    %v57 = vld [vmem:[#allocation5 + $0x78] sm:$0xff]
    %58 = vmatprep.subr.mxu0 0.0
    %59 = vmatpush1.msra.mxu0 %v42
    %60 = vmatprep.subr.mxu0 0.0
    %61 = vmatpush1.msra.mxu0 %v43
    %62 = vmatprep.subr.mxu0 0.0
    %63 = vmatpush1.msra.mxu0 %v44
    %64 = vmatprep.subr.mxu0 0.0
    %65 = vmatpush1.msra.mxu0 %v45
    %66 = vmatprep.subr.mxu0 0.0
    %67 = vmatpush1.msra.mxu0 %v46
    %68 = vmatprep.subr.mxu0 0.0
    %69 = vmatpush1.msra.mxu0 %v47
    %70 = vmatprep.subr.mxu0 0.0
    %71 = vmatpush1.msra.mxu0 %v48
    %72 = vmatprep.subr.mxu0 0.0
    %73 = vmatpush1.msra.mxu0 %v49
    %74 = vmatprep.subr.mxu0 0.0
    %75 = vmatpush1.msra.mxu0 %v50
    %76 = vmatprep.subr.mxu0 0.0
    %77 = vmatpush1.msra.mxu0 %v51
    %78 = vmatprep.subr.mxu0 0.0
    %79 = vmatpush1.msra.mxu0 %v52
    %80 = vmatprep.subr.mxu0 0.0
    %81 = vmatpush1.msra.mxu0 %v53
    %82 = vmatprep.subr.mxu0 0.0
    %83 = vmatpush1.msra.mxu0 %v54
    %84 = vmatprep.subr.mxu0 0.0
    %85 = vmatpush1.msra.mxu0 %v55
    %86 = vmatprep.subr.mxu0 0.0
    %87 = vmatpush1.msra.mxu0 %v56
    %88 = vmatprep.subr.mxu0 0.0
    %89 = vmatpush1.msra.mxu0 %v57
    %90 = vmatprep.subr.mxu0 0.0
    %91 = vmatpush1.msra.mxu0 0.0
    %92 = vmatprep.subr.mxu0 0.0
    %93 = vmatpush1.msra.mxu0 0.0
    %94 = vmatprep.subr.mxu0 0.0
    %95 = vmatpush1.msra.mxu0 0.0
    %96 = vmatprep.subr.mxu0 0.0
    %97 = vmatpush1.msra.mxu0 0.0
    %98 = vmatprep.subr.mxu0 0.0
    %99 = vmatpush1.msra.mxu0 0.0
    %100 = vmatprep.subr.mxu0 0.0
    %101 = vmatpush1.msra.mxu0 0.0
    %102 = vmatprep.subr.mxu0 0.0
    %103 = vmatpush1.msra.mxu0 0.0
    %104 = vmatprep.subr.mxu0 0.0
    %105 = vmatpush1.msra.mxu0 0.0
    %106 = vmatprep.subr.mxu0 0.0
    %107 = vmatpush1.msra.mxu0 0.0
    %108 = vmatprep.subr.mxu0 0.0
    %109 = vmatpush1.msra.mxu0 0.0
    %110 = vmatprep.subr.mxu0 0.0
    %111 = vmatpush1.msra.mxu0 0.0
    %112 = vmatprep.subr.mxu0 0.0
    %113 = vmatpush1.msra.mxu0 0.0
    %114 = vmatprep.subr.mxu0 0.0
    %115 = vmatpush1.msra.mxu0 0.0
    %116 = vmatprep.subr.mxu0 0.0
    %117 = vmatpush1.msra.mxu0 0.0
    %118 = vmatprep.subr.mxu0 0.0
    %119 = vmatpush1.msra.mxu0 0.0
    %120 = vmatprep.subr.mxu0 0.0
    %121 = vmatpush1.msra.mxu0 0.0
    %122 = vmatprep.mubr.f32.mxu0 0.0
    %123 = vmatmul.mubr.f32.gmra.mrb[0].mxu0 %v41
    %v124 = vpop.f32.mrb[0].mxu0
    %v125 = vadd.f32 0.0, %v124
    %v126 = vpop.f32.mrb[0].mxu0
    %127 = vdwg.mxu0
    %128 = vst [vmem:[#allocation8] sm:$0xff] %v125
    %v129 = vsub.f32 %v41, %v125
    %130 = vst [vmem:[#allocation7] sm:$0xff] %v129
    // Predicated region
    $region18: #{tpu_custom_call.1} parent=1 // pred_check
      _
    $region19: #{tpu_custom_call.1} parent=1 // pred_check_branch
      %132 = sbr.rel (0) target = $region21
    $region20: #{tpu_custom_call.1} parent=1 // pred_region
      %s134 = ssub.s32 128, 128
      %135 = vsyncadd [#allocation4], %s134
      %s137 = sshll.u32 [#allocation7], 4
      %s138 = int_to_ptr.vmem [resolvable:$true] %s137
      %140 = dma.vmem_to_hbm [thread:$0]  %s138, 128, %s2, [#allocation4]
    $region21: #{tpu_custom_call.1} parent=1 // pred_fallthru
      _
    // Predicated region
    $region22: #{tpu_custom_call.1} parent=1 // pred_check
      _
    $region23: #{tpu_custom_call.1} parent=1 // pred_check_branch
      %142 = sbr.rel (0) target = $region25
    $region24: #{tpu_custom_call.1} parent=1 // pred_region
      %s144 = ssub.s32 128, 128
      %145 = vsyncadd [#allocation9], %s144
      %s147 = sshll.u32 [#allocation8], 4
      %s148 = int_to_ptr.vmem [resolvable:$true] %s147
      %150 = dma.vmem_to_hbm [thread:$0]  %s148, 128, %s3, [#allocation9]
    $region25: #{tpu_custom_call.1} parent=1 // pred_fallthru
      _
    // Predicated region
    $region26: #{tpu_custom_call.1} parent=1 // pred_check
      _
    $region27: #{tpu_custom_call.1} parent=1 // pred_check_branch
      %152 = sbr.rel (0) target = $region29
    $region28: #{tpu_custom_call.1} parent=1 // pred_region
      %153 = dma.done [#allocation4], 128
    $region29: #{tpu_custom_call.1} parent=1 // pred_fallthru
      _
    // Predicated region
    $region30: #{tpu_custom_call.1} parent=1 // pred_check
      _
    $region31: #{tpu_custom_call.1} parent=1 // pred_check_branch
      %155 = sbr.rel (0) target = $region33
    $region32: #{tpu_custom_call.1} parent=1 // pred_region
      %156 = dma.done [#allocation9], 128
    $region33: #{tpu_custom_call.1} parent=1 // pred_fallthru
      _
    %157 = vsyncpa [#allocation3], 1
    %158 = vsyncpa [#allocation6], 1
    %159 = vsyncpa [#allocation4], 1
    %160 = vsyncpa [#allocation9], 1

</llo_original>
